<compile_context>
chip_gen: v7x
topology: tpu7x:2x2x1
jax: 0.10.0
libtpu: 0.0.40
codegen_flags: <defaults>
</compile_context>

<pallas_src>
import functools

import jax
import jax.numpy as jnp
import numpy as np
from jax.experimental import pallas as pl
from jax.experimental.pallas import tpu as pltpu


def _attn_fuse_kernel(q0_ref, k_ref, v_ref, o_ref, *, scale):
    # q0_ref: (C, TN)      query of CAV 0  (channels on sublanes, N on lanes)
    # k_ref : (L, C, TN)   keys of all L cavs
    # v_ref : (L, C, TN)   values of all L cavs
    # o_ref : (C, TN)      fused feature for CAV 0
    q0 = q0_ref[...].astype(jnp.float32)
    k = k_ref[...].astype(jnp.float32)
    v = v_ref[...].astype(jnp.float32)

    # score[l, n] = sum_c q0[c, n] * k[l, c, n] / sqrt(C)
    s = jnp.sum(q0[None, :, :] * k, axis=1) * scale              # (L, TN)

    # softmax over the cav axis (numerically stable, same result as torch)
    s = s - jnp.max(s, axis=0, keepdims=True)
    p = jnp.exp(s)
    # Exact reciprocal: the approximate EUP version cost ~3e-3 relative error,
    # which tripped the accuracy check.  This divide is per (L, TN) block and
    # is completely hidden behind the HBM traffic of k/v.
    p = p / jnp.sum(p, axis=0, keepdims=True)

    # ctx[c, n] = sum_l p[l, n] * v[l, c, n]
    ctx = jnp.sum(p[:, None, :] * v, axis=0)                     # (C, TN)
    o_ref[...] = ctx.astype(o_ref.dtype)


def _choose_tile(N, tile_n):
    """Largest 128-multiple <= tile_n dividing N; else pad N up to a multiple."""
    t = max(128, (tile_n // 128) * 128)
    cand = t
    while cand >= 128:
        if N % cand == 0:
            return cand, 0
        cand -= 128
    n_pad = pl.cdiv(N, t) * t
    return t, n_pad - N


def attention_fusion(q, k, v, *, tile_n=512):
    """Pallas implementation of AttentionFusion.forward.

    q, k, v: (cav_num, C, H, W) float32 (or bf16). Returns (C, H, W).
    """
    cav, C, H, W = q.shape
    N = H * W
    scale = 1.0 / float(np.sqrt(C))

    # Lane-dense layout: pure reshapes of NCHW, no transposes, and q is sliced
    # to CAV 0 before any work (the rest of q is never needed).
    q0 = q[0].reshape(C, N)            # (C, N)
    k_cn = k.reshape(cav, C, N)        # (cav, C, N)
    v_cn = v.reshape(cav, C, N)        # (cav, C, N)

    # tile_n=512 keeps the double-buffered block footprint well under the
    # 32 MiB default scoped VMEM even at C=256, cav=5, f32 (also v7x-safe).
    tile, pad = _choose_tile(N, tile_n)
    if pad:
        # Padded locations see all-zero scores -> uniform softmax over zero
        # values -> zero output; they are sliced off below. No NaN risk.
        q0 = jnp.pad(q0, ((0, 0), (0, pad)))
        k_cn = jnp.pad(k_cn, ((0, 0), (0, 0), (0, pad)))
        v_cn = jnp.pad(v_cn, ((0, 0), (0, 0), (0, pad)))
    n_pad = N + pad

    kernel = functools.partial(_attn_fuse_kernel, scale=scale)

    out_cn = pl.pallas_call(
        kernel,
        out_shape=jax.ShapeDtypeStruct((C, n_pad), q.dtype),
        grid_spec=pltpu.PrefetchScalarGridSpec(
            num_scalar_prefetch=0,
            grid=(n_pad // tile,),
            in_specs=[
                pl.BlockSpec((C, tile), lambda i: (0, i)),
                pl.BlockSpec((cav, C, tile), lambda i: (0, 0, i)),
                pl.BlockSpec((cav, C, tile), lambda i: (0, 0, i)),
            ],
            out_specs=pl.BlockSpec((C, tile), lambda i: (0, i)),
        ),
        compiler_params=pltpu.CompilerParams(
            dimension_semantics=("parallel",)),
    )(q0, k_cn, v_cn)

    if pad:
        out_cn = out_cn[:, :N]
    # (C, N) -> (C, H, W): free reshape, no transpose.
    return out_cn.reshape(C, H, W)


def _reference(q, k, v):
    """Pure-JAX reference mirroring the PyTorch module exactly."""
    cav, C, H, W = q.shape
    to_seq = lambda x: jnp.transpose(x.reshape(cav, C, -1), (2, 0, 1))  # (HW,cav,C)
    qs, ks, vs = to_seq(q), to_seq(k), to_seq(v)
    hi = jax.lax.Precision.HIGHEST
    score = jnp.einsum("nld,nmd->nlm", qs, ks, precision=hi) / np.sqrt(C)
    attn = jax.nn.softmax(score, axis=-1)
    ctx = jnp.einsum("nlm,nmd->nld", attn, vs, precision=hi)  # (HW, cav, C)
    x = jnp.transpose(ctx, (1, 2, 0)).reshape(cav, C, H, W)[0]
    return x


if __name__ == "__main__":
    cav_num, C, H, W = 2, 4, 16, 16
    key = jax.random.PRNGKey(0)
    kq, kk, kv = jax.random.split(key, 3)
    q = jax.random.normal(kq, (cav_num, C, H, W), dtype=jnp.float32)
    k = jax.random.normal(kk, (cav_num, C, H, W), dtype=jnp.float32)
    v = jax.random.normal(kv, (cav_num, C, H, W), dtype=jnp.float32)

    out = attention_fusion(q, k, v)
    out = jax.block_until_ready(out)

    ref = _reference(q, k, v)
    assert out.shape == (C, H, W), out.shape
    np.testing.assert_allclose(np.asarray(out), np.asarray(ref),
                               rtol=1e-3, atol=1e-3)
    print("KERNEL_OK")
</pallas_src>

<mosaic_0001>
module attributes {stable_mosaic.version = 11 : i64} {
  func.func @_attn_fuse_kernel(%arg0: i32, %arg1: memref<4x256xf32, #tpu.memory_space<vmem>>, %arg2: memref<2x4x256xf32, #tpu.memory_space<vmem>>, %arg3: memref<2x4x256xf32, #tpu.memory_space<vmem>>, %arg4: memref<4x256xf32, #tpu.memory_space<vmem>>) attributes {dimension_semantics = [#tpu.dimension_semantics<parallel>], iteration_bounds = array<i64: 1>, scalar_prefetch = 0 : i64, scratch_operands = 0 : i64, tpu.core_type = #tpu.core_type<tc>, window_params = [{transform_indices = @transform_0, window_bounds = array<i64: 4, 256>}, {transform_indices = @transform_1, window_bounds = array<i64: 2, 4, 256>}, {transform_indices = @transform_2, window_bounds = array<i64: 2, 4, 256>}, {transform_indices = @transform_3, window_bounds = array<i64: 4, 256>}]} {
    %c0 = arith.constant 0 : index
    %c0_0 = arith.constant 0 : index
    %0 = vector.load %arg1[%c0, %c0_0] : memref<4x256xf32, #tpu.memory_space<vmem>>, vector<4x256xf32>
    %c0_1 = arith.constant 0 : index
    %c0_2 = arith.constant 0 : index
    %c0_3 = arith.constant 0 : index
    %1 = vector.load %arg2[%c0_1, %c0_2, %c0_3] : memref<2x4x256xf32, #tpu.memory_space<vmem>>, vector<2x4x256xf32>
    %c0_4 = arith.constant 0 : index
    %c0_5 = arith.constant 0 : index
    %c0_6 = arith.constant 0 : index
    %2 = vector.load %arg3[%c0_4, %c0_5, %c0_6] : memref<2x4x256xf32, #tpu.memory_space<vmem>>, vector<2x4x256xf32>
    %3 = vector.shape_cast %0 : vector<4x256xf32> to vector<1x4x256xf32>
    %4 = vector.broadcast %3 : vector<1x4x256xf32> to vector<2x4x256xf32>
    %5 = arith.mulf %4, %1 : vector<2x4x256xf32>
    %cst = arith.constant dense<0.000000e+00> : vector<2x256xf32>
    %6 = vector.multi_reduction <add>, %5, %cst [1] : vector<2x4x256xf32> to vector<2x256xf32>
    %cst_7 = arith.constant 5.000000e-01 : f32
    %7 = vector.broadcast %cst_7 : f32 to vector<2x256xf32>
    %8 = arith.mulf %6, %7 : vector<2x256xf32>
    %cst_8 = arith.constant dense<0xFF800000> : vector<256xf32>
    %9 = vector.multi_reduction <maximumf>, %8, %cst_8 [0] : vector<2x256xf32> to vector<256xf32>
    %10 = vector.shape_cast %9 : vector<256xf32> to vector<1x256xf32>
    %11 = vector.broadcast %10 : vector<1x256xf32> to vector<2x256xf32>
    %12 = arith.subf %8, %11 : vector<2x256xf32>
    %13 = math.exp %12 : vector<2x256xf32>
    %cst_9 = arith.constant dense<0.000000e+00> : vector<256xf32>
    %14 = vector.multi_reduction <add>, %13, %cst_9 [0] : vector<2x256xf32> to vector<256xf32>
    %15 = vector.shape_cast %14 : vector<256xf32> to vector<1x256xf32>
    %16 = vector.broadcast %15 : vector<1x256xf32> to vector<2x256xf32>
    %17 = arith.divf %13, %16 : vector<2x256xf32>
    %18 = vector.shape_cast %17 : vector<2x256xf32> to vector<2x1x256xf32>
    %19 = vector.broadcast %18 : vector<2x1x256xf32> to vector<2x4x256xf32>
    %20 = arith.mulf %19, %2 : vector<2x4x256xf32>
    %cst_10 = arith.constant dense<0.000000e+00> : vector<4x256xf32>
    %21 = vector.multi_reduction <add>, %20, %cst_10 [0] : vector<2x4x256xf32> to vector<4x256xf32>
    %c0_11 = arith.constant 0 : index
    %c0_12 = arith.constant 0 : index
    %22 = vector.load %arg4[%c0_11, %c0_12] : memref<4x256xf32, #tpu.memory_space<vmem>>, vector<4x256xf32>
    tpu.vector_store %arg4[%c0_11, %c0_12], %21 {strides = array<i32>} : memref<4x256xf32, #tpu.memory_space<vmem>>, vector<4x256xf32>,
    return
  }
  func.func @transform_0(%arg0: i32) -> (i32, i32) {
    %c0_i32 = arith.constant 0 : i32
    %c0_i32_0 = arith.constant 0 : i32
    return %c0_i32, %arg0 : i32, i32
  }
  func.func @transform_1(%arg0: i32) -> (i32, i32, i32) {
    %c0_i32 = arith.constant 0 : i32
    %c0_i32_0 = arith.constant 0 : i32
    %c0_i32_1 = arith.constant 0 : i32
    return %c0_i32, %c0_i32_0, %arg0 : i32, i32, i32
  }
  func.func @transform_2(%arg0: i32) -> (i32, i32, i32) {
    %c0_i32 = arith.constant 0 : i32
    %c0_i32_0 = arith.constant 0 : i32
    %c0_i32_1 = arith.constant 0 : i32
    return %c0_i32, %c0_i32_0, %arg0 : i32, i32, i32
  }
  func.func @transform_3(%arg0: i32) -> (i32, i32) {
    %c0_i32 = arith.constant 0 : i32
    %c0_i32_0 = arith.constant 0 : i32
    return %c0_i32, %arg0 : i32, i32
  }
}

</mosaic_0001>

<llo_original>
// kernel: tpu_custom_call.1
$region0: #{tpu_custom_call.1}
  #allocation0 [shape = 'u32[]', space=smem, size = 0x4, offset = 0x4, fixed_abs, tag = 'smem constant byte address 0x4 - core index']
  #allocation1 [shape = 'u32[144,128]{1,0:T(1,128)}', space=vmem, size = 0x12000, scoped, tag = 'internal scratch']
  %s0 = inlined_call_operand.hbm [shape: f32[4,256], index: 0, kind: input, shape index: {}]
  %s1 = inlined_call_operand.hbm [shape: f32[2,4,256], index: 1, kind: input, shape index: {}]
  %s2 = inlined_call_operand.hbm [shape: f32[2,4,256], index: 2, kind: input, shape index: {}]
  %s3 = inlined_call_operand.hbm [shape: f32[4,256], index: 3, kind: output, shape index: {}]
  %s4 = sld [smem:[#allocation0]]
  $region34: #{tpu_custom_call.1} parent=0
    _
  %s6 = ssub.s32 1, %s4
  %s7 = scalar_select 0, %s6, %s4
  $region1: #{tpu_custom_call.1} parent=0
    #allocation2 [shape = 'u8[4096]{0}', space=vmem, size = 0x1000, scoped, tag = 'input window, operand 0, single buffered']
    #allocation3 [shape = 's32[1]{0}', space=sflag, size = 0x4, scoped, tag = 'scoped memory for tpu_custom_call.1']
    #allocation4 [shape = 's32[1]{0}', space=sflag, size = 0x4, scoped, tag = 'scoped memory for tpu_custom_call.1']
    #allocation5 [shape = 'u8[8192]{0}', space=vmem, size = 0x2000, scoped, tag = 'input window, operand 1, single buffered']
    #allocation6 [shape = 's32[1]{0}', space=sflag, size = 0x4, scoped, tag = 'scoped memory for tpu_custom_call.1']
    #allocation7 [shape = 'u8[8192]{0}', space=vmem, size = 0x2000, scoped, tag = 'input window, operand 2, single buffered']
    #allocation8 [shape = 'u8[4096]{0}', space=vmem, size = 0x1000, scoped, tag = 'output window, operand 0, single buffered']
    %8 = vsyncpa [#allocation3], 0
    %9 = vsyncpa [#allocation6], 0
    %10 = vsyncpa [#allocation4], 0
    // Predicated region
    $region2: #{tpu_custom_call.1} parent=1 // pred_check
      _
    $region3: #{tpu_custom_call.1} parent=1 // pred_check_branch
      %12 = sbr.rel (0) target = $region5
    $region4: #{tpu_custom_call.1} parent=1 // pred_region
      %s14 = ssub.s32 128, 128
      %15 = vsyncadd [#allocation3], %s14
      %s17 = sshll.u32 [#allocation2], 4
      %s18 = int_to_ptr.vmem [resolvable:$true] %s17
      %20 = dma.hbm_to_vmem [thread:$0]  %s0, 128, %s18, [#allocation3]
    $region5: #{tpu_custom_call.1} parent=1 // pred_fallthru
      _
    // Predicated region
    $region6: #{tpu_custom_call.1} parent=1 // pred_check
      _
    $region7: #{tpu_custom_call.1} parent=1 // pred_check_branch
      %22 = sbr.rel (0) target = $region9
    $region8: #{tpu_custom_call.1} parent=1 // pred_region
      %s24 = ssub.s32 256, 256
      %25 = vsyncadd [#allocation6], %s24
      %s26 = sshll.u32 [#allocation5], 4
      %s27 = int_to_ptr.vmem [resolvable:$true] %s26
      %32 = dma.hbm_to_vmem [thread:$0]  %s1, 256, %s27, [#allocation6], 128, 128, 8
    $region9: #{tpu_custom_call.1} parent=1 // pred_fallthru
      _
    // Predicated region
    $region10: #{tpu_custom_call.1} parent=1 // pred_check
      _
    $region11: #{tpu_custom_call.1} parent=1 // pred_check_branch
      %34 = sbr.rel (0) target = $region13
    $region12: #{tpu_custom_call.1} parent=1 // pred_region
      %s36 = ssub.s32 256, 256
      %37 = vsyncadd [#allocation6], %s36
      %s38 = sshll.u32 [#allocation7], 4
      %s39 = int_to_ptr.vmem [resolvable:$true] %s38
      %44 = dma.hbm_to_vmem [thread:$0]  %s2, 256, %s39, [#allocation6], 128, 128, 8
    $region13: #{tpu_custom_call.1} parent=1 // pred_fallthru
      _
    // Predicated region
    $region14: #{tpu_custom_call.1} parent=1 // pred_check
      _
    $region15: #{tpu_custom_call.1} parent=1 // pred_check_branch
      %46 = sbr.rel (0) target = $region17
    $region16: #{tpu_custom_call.1} parent=1 // pred_region
      %47 = dma.done [#allocation3], 128
    $region17: #{tpu_custom_call.1} parent=1 // pred_fallthru
      _
    // Predicated region
    $region18: #{tpu_custom_call.1} parent=1 // pred_check
      _
    $region19: #{tpu_custom_call.1} parent=1 // pred_check_branch
      %49 = sbr.rel (0) target = $region21
    $region20: #{tpu_custom_call.1} parent=1 // pred_region
      %50 = dma.done [#allocation6], 256
    $region21: #{tpu_custom_call.1} parent=1 // pred_fallthru
      _
    // Predicated region
    $region22: #{tpu_custom_call.1} parent=1 // pred_check
      _
    $region23: #{tpu_custom_call.1} parent=1 // pred_check_branch
      %52 = sbr.rel (0) target = $region25
    $region24: #{tpu_custom_call.1} parent=1 // pred_region
      %53 = dma.done [#allocation6], 256
    $region25: #{tpu_custom_call.1} parent=1 // pred_fallthru
      _
    %v54 = vld [vmem:[#allocation2] sm:$0xff]
    %v55 = vld [vmem:[#allocation5] sm:$0xff]
    %v56 = vld [vmem:[#allocation5 + $0x8] sm:$0xff]
    %v57 = vld [vmem:[#allocation7] sm:$0xff]
    %v58 = vld [vmem:[#allocation7 + $0x8] sm:$0xff]
    %v59 = vmul.f32 %v54, %v55
    %v60 = vmul.f32 %v54, %v56
    %v63 = vcombine.high %v59, %v59
    %v64 = vcombine.high %v60, %v60
    %vm67 = vcmask 1043456
    %v68 = vsel %vm67, %v59, 0.0
    %v69 = vrot.slane %v68, 4
    %v70 = vadd.f32 %v68, %v69
    %v71 = vrot.slane %v70, 2
    %v72 = vadd.f32 %v70, %v71
    %v73 = vrot.slane %v72, 1
    %v74 = vadd.f32 %v72, %v73
    %v75 = vsel %vm67, %v63, 0.0
    %v76 = vrot.slane %v75, 4
    %v77 = vadd.f32 %v75, %v76
    %v78 = vrot.slane %v77, 2
    %v79 = vadd.f32 %v77, %v78
    %v80 = vrot.slane %v79, 1
    %v81 = vadd.f32 %v79, %v80
    %v82 = vsel %vm67, %v60, 0.0
    %v83 = vrot.slane %v82, 4
    %v84 = vadd.f32 %v82, %v83
    %v85 = vrot.slane %v84, 2
    %v86 = vadd.f32 %v84, %v85
    %v87 = vrot.slane %v86, 1
    %v88 = vadd.f32 %v86, %v87
    %v89 = vsel %vm67, %v64, 0.0
    %v90 = vrot.slane %v89, 4
    %v91 = vadd.f32 %v89, %v90
    %v92 = vrot.slane %v91, 2
    %v93 = vadd.f32 %v91, %v92
    %v94 = vrot.slane %v93, 1
    %v95 = vadd.f32 %v93, %v94
    %v96 = vmul.f32 %v74, 0.5
    %v97 = vmul.f32 %v81, 0.5
    %v98 = vmul.f32 %v88, 0.5
    %v99 = vmul.f32 %v95, 0.5
    %v100 = vmax.f32 %v96, %v98
    %v101 = vmax.f32 %v97, %v99
    %v102 = vsub.f32 %v96, %v100
    %v103 = vsub.f32 %v97, %v101
    %v104 = vsub.f32 %v98, %v100
    %v105 = vsub.f32 %v99, %v101
    %v106 = vmul.f32 %v102, 1.442695
    %v107 = vpow.pop %v106
    %v108 = vmul.f32 %v103, 1.442695
    %v109 = vpow.pop %v108
    %v110 = vmul.f32 %v104, 1.442695
    %v111 = vpow.pop %v110
    %v112 = vmul.f32 %v105, 1.442695
    %v113 = vpow.pop %v112
    %v118 = vrot.slane %v111, 7
    %vm119 = vcmask 1041409
    %v120 = vsel %vm119, %v118, %v107
    %v121 = vrot.slane %v113, 7
    %v122 = vsel %vm119, %v121, %v109
    %vm125 = vcmask 1041408
    %v126 = vsel %vm125, %v120, 0.0
    %v127 = vrot.slane %v126, 4
    %v128 = vadd.f32 %v126, %v127
    %v129 = vrot.slane %v128, 2
    %v130 = vadd.f32 %v128, %v129
    %v131 = vrot.slane %v130, 1
    %v132 = vadd.f32 %v130, %v131
    %v133 = vsel %vm125, %v122, 0.0
    %v134 = vrot.slane %v133, 4
    %v135 = vadd.f32 %v133, %v134
    %v136 = vrot.slane %v135, 2
    %v137 = vadd.f32 %v135, %v136
    %v138 = vrot.slane %v137, 1
    %v139 = vadd.f32 %v137, %v138
    %v140 = vlaneseq
    %v141 = vshrl.u32 %v140, 7
    %v142 = vsub.s32 0, %v141
    %v143 = vrot.slane %v132, %v142
    %v144 = vlaneseq
    %v145 = vshrl.u32 %v144, 7
    %v146 = vsub.s32 0, %v145
    %v147 = vrot.slane %v139, %v146
    %v148 = vrcp.pop %v143
    %v149 = vmul.f32 %v107, %v148
    %v150 = vrcp.pop %v147
    %v151 = vmul.f32 %v109, %v150
    %v152 = vmul.f32 %v111, %v148
    %v153 = vmul.f32 %v113, %v150
    %v154 = vlaneseq
    %v155 = vshrl.u32 %v154, 7
    %v156 = vsub.s32 0, %v155
    %v157 = vrot.slane %v149, %v156
    %v158 = vlaneseq
    %v159 = vshrl.u32 %v158, 7
    %v160 = vsub.s32 0, %v159
    %v161 = vrot.slane %v151, %v160
    %v162 = vlaneseq
    %v163 = vshrl.u32 %v162, 7
    %v164 = vsub.s32 0, %v163
    %v165 = vrot.slane %v152, %v164
    %v166 = vlaneseq
    %v167 = vshrl.u32 %v166, 7
    %v168 = vsub.s32 0, %v167
    %v169 = vrot.slane %v153, %v168
    %v172 = vcombine.high %v57, %v57
    %v173 = vcombine.high %v58, %v58
    %v176 = vmul.f32 %v157, %v57
    %v177 = vmul.f32 %v161, %v172
    %v178 = vmul.f32 %v165, %v58
    %v179 = vmul.f32 %v169, %v173
    %v180 = vsel %vm67, %v176, 0.0
    %v181 = vsel %vm67, %v178, 0.0
    %v182 = vadd.f32 %v180, %v181
    %v183 = vsel %vm67, %v177, 0.0
    %v184 = vsel %vm67, %v179, 0.0
    %v185 = vadd.f32 %v183, %v184
    %v188 = vcombine.low %v182, %v185
    %190 = vst [vmem:[#allocation8] sm:$0xff] %v188
    // Predicated region
    $region26: #{tpu_custom_call.1} parent=1 // pred_check
      _
    $region27: #{tpu_custom_call.1} parent=1 // pred_check_branch
      %192 = sbr.rel (0) target = $region29
    $region28: #{tpu_custom_call.1} parent=1 // pred_region
      %s194 = ssub.s32 128, 128
      %195 = vsyncadd [#allocation4], %s194
      %s197 = sshll.u32 [#allocation8], 4
      %s198 = int_to_ptr.vmem [resolvable:$true] %s197
      %200 = dma.vmem_to_hbm [thread:$0]  %s198, 128, %s3, [#allocation4]
    $region29: #{tpu_custom_call.1} parent=1 // pred_fallthru
      _
    // Predicated region
    $region30: #{tpu_custom_call.1} parent=1 // pred_check
      _
    $region31: #{tpu_custom_call.1} parent=1 // pred_check_branch
      %202 = sbr.rel (0) target = $region33
    $region32: #{tpu_custom_call.1} parent=1 // pred_region
      %203 = dma.done [#allocation4], 128
    $region33: #{tpu_custom_call.1} parent=1 // pred_fallthru
      _
    %204 = vsyncpa [#allocation3], 1
    %205 = vsyncpa [#allocation6], 1
    %206 = vsyncpa [#allocation4], 1

</llo_original>
